<compile_context>
chip_gen: v7x
topology: tpu7x:2x2x1
jax: 0.10.0
libtpu: 0.0.40
codegen_flags: <defaults>
</compile_context>

<pallas_src>
import functools

import numpy as np

import jax
import jax.numpy as jnp
from jax.experimental import pallas as pl
from jax.experimental.pallas import tpu as pltpu


def _focal_loss_kernel(pred_ref, lbl_ref, out_ref, acc_ref, *,
                       alpha_vec, gamma, smooth, num_classes, hw, rows_tile):
    j = pl.program_id(1)

    @pl.when(j == 0)
    def _init():
        acc_ref[...] = jnp.zeros_like(acc_ref)

    x = pred_ref[...].astype(jnp.float32)            # (C, R, 128) logits
    lbl = lbl_ref[...]                               # (R, 128) int32 labels

    # --- softmax over the class axis (outer dim => per-vreg elementwise ops)
    m = jnp.max(x, axis=0, keepdims=True)            # (1, R, 128)
    e = jnp.exp(x - m)                               # (C, R, 128) only big transcendental
    s = jnp.sum(e, axis=0)                           # (R, 128)

    # --- single per-class select pass: gather e[target] and alpha[target]
    e_t = jnp.zeros_like(s)
    a_pix = jnp.zeros_like(s)
    for c in range(num_classes):
        is_c = lbl == c
        e_t = jnp.where(is_c, e[c], e_t)
        a_pix = jnp.where(is_c, jnp.float32(alpha_vec[c]), a_pix)

    # --- closed-form smoothed pt:  pt = lo + (hi - lo) * p_target + smooth
    lo = (smooth / max(num_classes - 1, 1)) if smooth else 0.0
    hi = (1.0 - smooth) if smooth else 1.0
    inv_s = pl.reciprocal(s, approx=True)            # EUP slot, ~free
    pt = lo + (hi - lo) * (e_t * inv_s) + smooth     # (R, 128)
    logpt = jnp.log(pt)

    # --- (1 - pt)**gamma: repeated multiply for small integer gamma (default 2)
    one_minus_pt = 1.0 - pt
    if float(gamma) == int(gamma) and 0 <= int(gamma) <= 8:
        fw = jnp.ones_like(one_minus_pt)
        for _ in range(int(gamma)):
            fw = fw * one_minus_pt
    else:
        fw = jnp.power(one_minus_pt, jnp.float32(gamma))

    loss = -a_pix * fw * logpt                       # (R, 128)

    # --- in-kernel tail masking: pixels beyond HW (ragged last row-tile and
    # 128-lane alignment pad) and out-of-range labels contribute exactly 0.
    # Explicit where(), never 0 * (-inf).
    row_ids = j * rows_tile + jax.lax.broadcasted_iota(jnp.int32, lbl.shape, 0)
    pix_ids = row_ids * 128 + jax.lax.broadcasted_iota(jnp.int32, lbl.shape, 1)
    valid = jnp.logical_and(pix_ids < hw,
                            jnp.logical_and(lbl >= 0, lbl < num_classes))
    acc_ref[...] += jnp.where(valid, loss, 0.0)      # dense (R, 128) accumulator

    @pl.when(j == pl.num_programs(1) - 1)
    def _finalize():
        # one lane-dense (1, 128) partial per image; XLA sums the N partials
        out_ref[...] = jnp.sum(acc_ref[...], axis=0, keepdims=True)


def focal_loss(logit, target, *, alpha=(1.0, 3.0), gamma=2, balance_index=0,
               smooth=1e-5, size_average=True, tile_rows=None):
    """logit: (N, C, H, W) float logits. target: (N, H, W) int class labels."""
    if smooth is not None and (smooth < 0 or smooth > 1.0):
        raise ValueError('smooth value should be in [0,1]')
    smooth = float(smooth) if smooth else 0.0

    N, C = int(logit.shape[0]), int(logit.shape[1])
    HW = 1
    for d in logit.shape[2:]:
        HW *= int(d)

    # --- alpha handling, mirroring the torch module (host-side constants)
    if alpha is None:
        alpha_vec = [1.0] * C
    elif isinstance(alpha, (list, tuple, np.ndarray)):
        arr = np.asarray(alpha, dtype=np.float64)
        assert arr.size == C
        arr = arr / arr.sum()
        alpha_vec = [float(v) for v in arr.reshape(-1)]
    elif isinstance(alpha, float):
        arr = np.full(C, 1.0 - alpha, dtype=np.float64)
        arr[balance_index] = alpha
        alpha_vec = [float(v) for v in arr]
    else:
        raise TypeError('Not support alpha type')

    # --- sublane-dense native layout: (N, C, H, W) -> (N, C, rows, 128), free
    # contiguity-preserving reshape (no transpose, no dtype change).
    pred = logit.reshape(N, C, HW)                   # bf16 streams as bf16
    lbl = target.reshape(N, HW).astype(jnp.int32)
    HW128 = ((HW + 127) // 128) * 128
    if HW128 != HW:
        # TODO(synk): this minimal 128-lane alignment pad still copies the
        # tensor once in HBM; a fully pad-free path needs a 2-D (H, W) block.
        pred = jnp.pad(pred, ((0, 0), (0, 0), (0, HW128 - HW)))
        lbl = jnp.pad(lbl, ((0, 0), (0, HW128 - HW)), constant_values=-1)
    rows = HW128 // 128
    pred = pred.reshape(N, C, rows, 128)
    lbl = lbl.reshape(N, rows, 128)

    # --- tile selection: budget counts double-buffered inputs AND the live
    # in-kernel f32 intermediates; ~10 MiB target fits v5e/v6e/v7x comfortably.
    in_bytes = jnp.dtype(pred.dtype).itemsize
    bytes_per_row = (2 * C * 128 * in_bytes          # double-buffered pred block
                     + 3 * C * 128 * 4               # f32 upcast + exp intermediates
                     + 2 * 128 * 4                   # double-buffered label block
                     + 10 * 128 * 4)                 # (R,128) temps + accumulator
    if tile_rows is None:
        tile_rows = max(8, (10 * 1024 * 1024) // bytes_per_row)
    tile_rows = int(tile_rows)
    if rows <= tile_rows:
        tile_rows = rows                             # full-dim block: any size OK
    else:
        tile_rows = max(8, (tile_rows // 8) * 8)     # (8, 128) block alignment

    grid = (N, pl.cdiv(rows, tile_rows))
    kernel = functools.partial(
        _focal_loss_kernel, alpha_vec=tuple(alpha_vec), gamma=gamma,
        smooth=smooth, num_classes=C, hw=HW, rows_tile=tile_rows)

    partials = pl.pallas_call(
        kernel,
        out_shape=jax.ShapeDtypeStruct((N, 1, 128), jnp.float32),
        grid_spec=pltpu.PrefetchScalarGridSpec(
            num_scalar_prefetch=0,
            grid=grid,
            in_specs=[
                pl.BlockSpec((None, C, tile_rows, 128), lambda n, j: (n, 0, j, 0)),
                pl.BlockSpec((None, tile_rows, 128), lambda n, j: (n, j, 0)),
            ],
            out_specs=pl.BlockSpec((None, 1, 128), lambda n, j: (n, 0, 0)),
            scratch_shapes=[pltpu.VMEM((tile_rows, 128), jnp.float32)],
        ),
        compiler_params=pltpu.CompilerParams(
            dimension_semantics=("parallel", "arbitrary"),
            vmem_limit_bytes=32 * 1024 * 1024),
    )(pred, lbl)

    total = jnp.sum(partials)                        # (N, 1, 128) -> scalar
    if size_average:
        return total / jnp.float32(N * HW)
    return total


def _reference_loss(logit, target, *, alpha=(1.0, 3.0), gamma=2, balance_index=0,
                    smooth=1e-5, size_average=True):
    """Plain-JAX mirror of the PyTorch FocalLoss.forward."""
    N, C = logit.shape[0], logit.shape[1]
    p = jax.nn.softmax(logit.astype(jnp.float32), axis=1)
    p = p.reshape(N, C, -1).transpose(0, 2, 1).reshape(-1, C)     # (M, C)
    t = target.reshape(-1).astype(jnp.int32)
    arr = np.asarray(alpha, dtype=np.float64)
    arr = arr / arr.sum()
    oh = jax.nn.one_hot(t, C, dtype=jnp.float32)
    oh = jnp.clip(oh, smooth / (C - 1), 1.0 - smooth)
    pt = (oh * p).sum(axis=1) + smooth
    logpt = jnp.log(pt)
    a = jnp.asarray(arr, jnp.float32)[t]
    loss = -a * (1.0 - pt) ** gamma * logpt
    return loss.mean() if size_average else loss.sum()


if __name__ == "__main__":
    key = jax.random.PRNGKey(0)
    k1, k2 = jax.random.split(key, 2)

    # default alpha = [1.0, 3.0] implies num_class == 2
    N, C, H, W = 2, 2, 16, 16
    logit = jax.random.normal(k1, (N, C, H, W), dtype=jnp.float32)
    target = jax.random.randint(k2, (N, H, W), 0, C, dtype=jnp.int32)

    out = focal_loss(logit, target)
    out = jax.block_until_ready(out)

    ref = jax.block_until_ready(_reference_loss(logit, target))
    # tolerance accounts for the approx (EUP) reciprocal in the softmax denom
    assert jnp.allclose(out, ref, rtol=2e-3, atol=1e-5), (out, ref)

    print("KERNEL_OK")
</pallas_src>

<mosaic_0001>
module attributes {stable_mosaic.version = 11 : i64} {
  func.func @_focal_loss_kernel(%arg0: i32, %arg1: i32, %arg2: memref<1x2x2x128xf32, #tpu.memory_space<vmem>>, %arg3: memref<1x2x128xi32, #tpu.memory_space<vmem>>, %arg4: memref<1x1x128xf32, #tpu.memory_space<vmem>>, %arg5: memref<2x128xf32, #tpu.memory_space<vmem>>) attributes {dimension_semantics = [#tpu.dimension_semantics<parallel>, #tpu.dimension_semantics<arbitrary>], iteration_bounds = array<i64: 2, 1>, scalar_prefetch = 0 : i64, scratch_operands = 1 : i64, tpu.core_type = #tpu.core_type<tc>, window_params = [{transform_indices = @transform_0, window_bounds = array<i64: 1, 2, 2, 128>}, {transform_indices = @transform_1, window_bounds = array<i64: 1, 2, 128>}, {transform_indices = @transform_2, window_bounds = array<i64: 1, 1, 128>}]} {
    %c0_i32 = arith.constant 0 : i32
    %0 = arith.cmpi eq, %arg1, %c0_i32 : i32
    %1 = arith.extui %0 : i1 to i32
    %c0_i32_0 = arith.constant 0 : i32
    %2 = arith.cmpi ne, %1, %c0_i32_0 : i32
    scf.if %2 {
      %cst_28 = arith.constant 0.000000e+00 : f32
      %71 = vector.broadcast %cst_28 : f32 to vector<2x128xf32>
      %c0_29 = arith.constant 0 : index
      %c0_30 = arith.constant 0 : index
      %72 = vector.load %arg5[%c0_29, %c0_30] : memref<2x128xf32, #tpu.memory_space<vmem>>, vector<2x128xf32>
      tpu.vector_store %arg5[%c0_29, %c0_30], %71 {strides = array<i32>} : memref<2x128xf32, #tpu.memory_space<vmem>>, vector<2x128xf32>,
    } else {
    }
    %c0 = arith.constant 0 : index
    %c0_1 = arith.constant 0 : index
    %c0_2 = arith.constant 0 : index
    %c0_3 = arith.constant 0 : index
    %3 = vector.load %arg2[%c0, %c0_1, %c0_2, %c0_3] : memref<1x2x2x128xf32, #tpu.memory_space<vmem>>, vector<1x2x2x128xf32>
    %4 = vector.shape_cast %3 : vector<1x2x2x128xf32> to vector<2x2x128xf32>
    %c0_4 = arith.constant 0 : index
    %c0_5 = arith.constant 0 : index
    %c0_6 = arith.constant 0 : index
    %5 = vector.load %arg3[%c0_4, %c0_5, %c0_6] : memref<1x2x128xi32, #tpu.memory_space<vmem>>, vector<1x2x128xi32>
    %6 = vector.shape_cast %5 : vector<1x2x128xi32> to vector<2x128xi32>
    %cst = arith.constant dense<0xFF800000> : vector<2x128xf32>
    %7 = vector.multi_reduction <maximumf>, %4, %cst [0] : vector<2x2x128xf32> to vector<2x128xf32>
    %8 = vector.shape_cast %7 : vector<2x128xf32> to vector<1x2x128xf32>
    %9 = vector.broadcast %8 : vector<1x2x128xf32> to vector<2x2x128xf32>
    %10 = arith.subf %4, %9 : vector<2x2x128xf32>
    %11 = math.exp %10 : vector<2x2x128xf32>
    %cst_7 = arith.constant dense<0.000000e+00> : vector<2x128xf32>
    %12 = vector.multi_reduction <add>, %11, %cst_7 [0] : vector<2x2x128xf32> to vector<2x128xf32>
    %cst_8 = arith.constant 0.000000e+00 : f32
    %13 = vector.broadcast %cst_8 : f32 to vector<2x128xf32>
    %cst_9 = arith.constant 0.000000e+00 : f32
    %14 = vector.broadcast %cst_9 : f32 to vector<2x128xf32>
    %c0_i32_10 = arith.constant 0 : i32
    %15 = vector.broadcast %c0_i32_10 : i32 to vector<2x128xi32>
    %16 = arith.cmpi eq, %6, %15 : vector<2x128xi32>
    %17 = vector.extract_strided_slice %11 {offsets = [0, 0, 0], sizes = [1, 2, 128], strides = [1, 1, 1]} : vector<2x2x128xf32> to vector<1x2x128xf32>
    %18 = vector.shape_cast %17 : vector<1x2x128xf32> to vector<2x128xf32>
    %19 = arith.select %16, %18, %13 : vector<2x128xi1>, vector<2x128xf32>
    %cst_11 = arith.constant 2.500000e-01 : f32
    %20 = vector.broadcast %cst_11 : f32 to vector<2x128xf32>
    %21 = arith.select %16, %20, %14 : vector<2x128xi1>, vector<2x128xf32>
    %c1_i32 = arith.constant 1 : i32
    %22 = vector.broadcast %c1_i32 : i32 to vector<2x128xi32>
    %23 = arith.cmpi eq, %6, %22 : vector<2x128xi32>
    %24 = vector.extract_strided_slice %11 {offsets = [1, 0, 0], sizes = [1, 2, 128], strides = [1, 1, 1]} : vector<2x2x128xf32> to vector<1x2x128xf32>
    %25 = vector.shape_cast %24 : vector<1x2x128xf32> to vector<2x128xf32>
    %26 = arith.select %23, %25, %19 : vector<2x128xi1>, vector<2x128xf32>
    %cst_12 = arith.constant 7.500000e-01 : f32
    %27 = vector.broadcast %cst_12 : f32 to vector<2x128xf32>
    %28 = arith.select %23, %27, %21 : vector<2x128xi1>, vector<2x128xf32>
    %29 = tpu.reciprocal %12 {approx = true} : vector<2x128xf32> -> vector<2x128xf32>
    %30 = arith.mulf %26, %29 : vector<2x128xf32>
    %cst_13 = arith.constant 0.999979972 : f32
    %31 = vector.broadcast %cst_13 : f32 to vector<2x128xf32>
    %32 = arith.mulf %31, %30 : vector<2x128xf32>
    %cst_14 = arith.constant 9.99999974E-6 : f32
    %33 = vector.broadcast %cst_14 : f32 to vector<2x128xf32>
    %34 = arith.addf %33, %32 : vector<2x128xf32>
    %cst_15 = arith.constant 9.99999974E-6 : f32
    %35 = vector.broadcast %cst_15 : f32 to vector<2x128xf32>
    %36 = arith.addf %34, %35 : vector<2x128xf32>
    %37 = math.log %36 : vector<2x128xf32>
    %cst_16 = arith.constant 1.000000e+00 : f32
    %38 = vector.broadcast %cst_16 : f32 to vector<2x128xf32>
    %39 = arith.subf %38, %36 : vector<2x128xf32>
    %cst_17 = arith.constant 1.000000e+00 : f32
    %40 = vector.broadcast %cst_17 : f32 to vector<2x128xf32>
    %41 = arith.mulf %40, %39 : vector<2x128xf32>
    %42 = arith.mulf %41, %39 : vector<2x128xf32>
    %cst_18 = arith.constant 0.000000e+00 : f32
    %43 = vector.broadcast %cst_18 : f32 to vector<2x128xf32>
    %44 = arith.subf %43, %28 : vector<2x128xf32>
    %45 = arith.mulf %44, %42 : vector<2x128xf32>
    %46 = arith.mulf %45, %37 : vector<2x128xf32>
    %c2_i32 = arith.constant 2 : i32
    %47 = arith.muli %arg1, %c2_i32 : i32
    %48 = tpu.iota {dimensions = array<i32: 0>} : vector<2x128xi32>
    %49 = vector.broadcast %47 : i32 to vector<2x128xi32>
    %50 = arith.addi %49, %48 : vector<2x128xi32>
    %c128_i32 = arith.constant 128 : i32
    %51 = vector.broadcast %c128_i32 : i32 to vector<2x128xi32>
    %52 = arith.muli %50, %51 : vector<2x128xi32>
    %53 = tpu.iota {dimensions = array<i32: 1>} : vector<2x128xi32>
    %54 = arith.addi %52, %53 : vector<2x128xi32>
    %c256_i32 = arith.constant 256 : i32
    %55 = vector.broadcast %c256_i32 : i32 to vector<2x128xi32>
    %56 = arith.cmpi slt, %54, %55 : vector<2x128xi32>
    %c0_i32_19 = arith.constant 0 : i32
    %57 = vector.broadcast %c0_i32_19 : i32 to vector<2x128xi32>
    %58 = arith.cmpi sge, %6, %57 : vector<2x128xi32>
    %c2_i32_20 = arith.constant 2 : i32
    %59 = vector.broadcast %c2_i32_20 : i32 to vector<2x128xi32>
    %60 = arith.cmpi slt, %6, %59 : vector<2x128xi32>
    %61 = arith.andi %58, %60 : vector<2x128xi1>
    %62 = arith.andi %56, %61 : vector<2x128xi1>
    %c0_21 = arith.constant 0 : index
    %c0_22 = arith.constant 0 : index
    %63 = vector.load %arg5[%c0_21, %c0_22] : memref<2x128xf32, #tpu.memory_space<vmem>>, vector<2x128xf32>
    %cst_23 = arith.constant 0.000000e+00 : f32
    %64 = vector.broadcast %cst_23 : f32 to vector<2x128xf32>
    %65 = arith.select %62, %46, %64 : vector<2x128xi1>, vector<2x128xf32>
    %66 = arith.addf %63, %65 : vector<2x128xf32>
    %c0_24 = arith.constant 0 : index
    %c0_25 = arith.constant 0 : index
    %67 = vector.load %arg5[%c0_24, %c0_25] : memref<2x128xf32, #tpu.memory_space<vmem>>, vector<2x128xf32>
    tpu.vector_store %arg5[%c0_24, %c0_25], %66 {strides = array<i32>} : memref<2x128xf32, #tpu.memory_space<vmem>>, vector<2x128xf32>,
    %c0_i32_26 = arith.constant 0 : i32
    %68 = arith.cmpi eq, %arg1, %c0_i32_26 : i32
    %69 = arith.extui %68 : i1 to i32
    %c0_i32_27 = arith.constant 0 : i32
    %70 = arith.cmpi ne, %69, %c0_i32_27 : i32
    scf.if %70 {
      %c0_28 = arith.constant 0 : index
      %c0_29 = arith.constant 0 : index
      %71 = vector.load %arg5[%c0_28, %c0_29] : memref<2x128xf32, #tpu.memory_space<vmem>>, vector<2x128xf32>
      %cst_30 = arith.constant dense<0.000000e+00> : vector<128xf32>
      %72 = vector.multi_reduction <add>, %71, %cst_30 [0] : vector<2x128xf32> to vector<128xf32>
      %73 = vector.shape_cast %72 : vector<128xf32> to vector<1x128xf32>
      %c0_31 = arith.constant 0 : index
      %c0_32 = arith.constant 0 : index
      %c0_33 = arith.constant 0 : index
      %74 = vector.load %arg4[%c0_31, %c0_32, %c0_33] : memref<1x1x128xf32, #tpu.memory_space<vmem>>, vector<1x1x128xf32>
      %75 = vector.shape_cast %74 : vector<1x1x128xf32> to vector<1x128xf32>
      %76 = vector.shape_cast %73 : vector<1x128xf32> to vector<1x1x128xf32>
      tpu.vector_store %arg4[%c0_31, %c0_32, %c0_33], %76 {strides = array<i32>} : memref<1x1x128xf32, #tpu.memory_space<vmem>>, vector<1x1x128xf32>,
    } else {
    }
    return
  }
  func.func @transform_0(%arg0: i32, %arg1: i32) -> (i32, i32, i32, i32) {
    %c0_i32 = arith.constant 0 : i32
    %c0_i32_0 = arith.constant 0 : i32
    %c0_i32_1 = arith.constant 0 : i32
    return %arg0, %c0_i32, %arg1, %c0_i32_0 : i32, i32, i32, i32
  }
  func.func @transform_1(%arg0: i32, %arg1: i32) -> (i32, i32, i32) {
    %c0_i32 = arith.constant 0 : i32
    %c0_i32_0 = arith.constant 0 : i32
    return %arg0, %arg1, %c0_i32 : i32, i32, i32
  }
  func.func @transform_2(%arg0: i32, %arg1: i32) -> (i32, i32, i32) {
    %c0_i32 = arith.constant 0 : i32
    %c0_i32_0 = arith.constant 0 : i32
    %c0_i32_1 = arith.constant 0 : i32
    return %arg0, %c0_i32, %c0_i32_0 : i32, i32, i32
  }
}

</mosaic_0001>

<llo_original>
// kernel: tpu_custom_call.1
$region0: #{tpu_custom_call.1}
  #allocation0 [shape = 'u32[]', space=smem, size = 0x4, offset = 0x4, fixed_abs, tag = 'smem constant byte address 0x4 - core index']
  #allocation1 [shape = 'u32[144,128]{1,0:T(1,128)}', space=vmem, size = 0x12000, scoped, tag = 'internal scratch']
  #allocation2 [shape = 'f32[2,128]{1,0:T(2,128)}', space=vmem, size = 0x400, scoped, tag = 'scratch operand']
  %s0 = inlined_call_operand.hbm [shape: f32[2,2,2,128], index: 0, kind: input, shape index: {}]
  %s1 = inlined_call_operand.hbm [shape: s32[2,2,128], index: 1, kind: input, shape index: {}]
  %s2 = inlined_call_operand.hbm [shape: f32[2,1,128], index: 2, kind: output, shape index: {}]
  %s3 = sld [smem:[#allocation0]]
  $region57: #{tpu_custom_call.1} parent=0
    _
  %s5 = ssub.s32 1, %s3
  %s6 = scalar_select 0, %s5, %s3
  $region1: #{tpu_custom_call.1} parent=0
    #allocation3 [shape = 'u8[4096]{0}', space=vmem, size = 0x1000, scoped, tag = 'input window, operand 0']
    #allocation4 [shape = 's32[2]{0}', space=sflag, size = 0x8, scoped, tag = 'scoped memory for tpu_custom_call.1']
    #allocation5 [shape = 's32[2]{0}', space=sflag, size = 0x8, scoped, tag = 'scoped memory for tpu_custom_call.1']
    #allocation6 [shape = 'u8[2048]{0}', space=vmem, size = 0x800, scoped, tag = 'input window, operand 1']
    #allocation7 [shape = 's32[2]{0}', space=sflag, size = 0x8, scoped, tag = 'scoped memory for tpu_custom_call.1']
    #allocation8 [shape = 'u8[1024]{0}', space=vmem, size = 0x400, scoped, tag = 'output window, operand 0']
    %7 = vsyncpa [#allocation4], 0
    %s8 = scalar_lea.sflag [#allocation4], 1
    %9 = vsyncpa %s8, 0
    %10 = vsyncpa [#allocation7], 0
    %s11 = scalar_lea.sflag [#allocation7], 1
    %12 = vsyncpa %s11, 0
    %13 = vsyncpa [#allocation5], 0
    %s14 = scalar_lea.sflag [#allocation5], 1
    %15 = vsyncpa %s14, 0
    loop: start=0, step=1, limit=4
    $region2: #{tpu_custom_call.1} parent=1 // loop_pre_header
      _
    $region3: #{tpu_custom_call.1} parent=1 // loop_header
      %s17 = sphi 0, %s21
      %p18 = scmp.ge.s32.totalorder %s17, 4
      %s24 = sphi 0, %s36
      %s25 = sphi 0, %s32
      %s26 = sphi 0, %s24
      %s27 = sphi 0, %s25
      %s28 = sphi 0, %s26
      %s29 = sphi 0, %s27
      %s41 = sphi 0, %s43
      %s44 = sphi 0, %s41
      %s45 = sphi 0, %s44
      %s61 = sphi 0, %s45
      %s69 = sphi 0, %s71
      %s72 = sphi 0, %s69
      %s73 = sphi 0, %s72
      %s89 = sphi 0, %s73
      %s95 = sphi 0, %s97
      %s98 = sphi 0, %s95
      %s99 = sphi 0, %s98
      %s115 = sphi 0, %s99
    $region4: #{tpu_custom_call.1} parent=1 // loop_header_branch
      %20 = sbr.rel (%p18) target = $region8
    $region5: #{tpu_custom_call.1} parent=1 // loop_body
      %s22 = ssub.s32 %s17, 1
      %s23 = ssub.s32 %s17, 2
      %s30 = sadd.s32 1, %s25
      %p31 = scmp.ge.s32.totalorder %s30, 1
      %s32 = scalar_select %p31, 0, %s30
      %s33 = sadd.s32 1, %s24
      %s34 = scalar_select %p31, %s33, %s24
      %p35 = scmp.ge.s32.totalorder %s34, 2
      %s36 = scalar_select %p35, 0, %s34
      %s37 = ssub.s32 %s24, %s36
      %s38 = ssub.s32 %s25, %s32
      %s39 = sor.u32 %s37, %s38
      %p40 = scmp.eq.s32.totalorder %s39, 0
      %s42 = sadd.s32 %s41, 1
      %s43 = scalar_select %p40, %s41, %s42
      %p46 = pneg %p40
      %p47 = scmp.eq.s32.totalorder %s17, 1
      %p48 = por %p46, %p47
      %p49 = scmp.ne.s32.totalorder %s41, %s44
      %p50 = scmp.eq.s32.totalorder %s17, 0
      %p51 = por %p49, %p50
      %p52 = scmp.ne.s32.totalorder %s41, %s44
      %p53 = scmp.eq.s32.totalorder %s22, 1
      %p54 = por %p52, %p53
      %p55 = scmp.ne.s32.totalorder %s44, %s45
      %p56 = scmp.eq.s32.totalorder %s22, 0
      %p57 = por %p55, %p56
      %p58 = scmp.ne.s32.totalorder %s44, %s45
      %p59 = scmp.eq.s32.totalorder %s23, 1
      %p60 = por %p58, %p59
      %p62 = scmp.ne.s32.totalorder %s45, %s61
      %p63 = scmp.eq.s32.totalorder %s23, 0
      %p64 = por %p62, %p63
      %s65 = ssub.s32 %s24, %s36
      %s66 = ssub.s32 %s25, %s32
      %s67 = sor.u32 %s65, %s66
      %p68 = scmp.eq.s32.totalorder %s67, 0
      %s70 = sadd.s32 %s69, 1
      %s71 = scalar_select %p68, %s69, %s70
      %p74 = pneg %p68
      %p75 = scmp.eq.s32.totalorder %s17, 1
      %p76 = por %p74, %p75
      %p77 = scmp.ne.s32.totalorder %s69, %s72
      %p78 = scmp.eq.s32.totalorder %s17, 0
      %p79 = por %p77, %p78
      %p80 = scmp.ne.s32.totalorder %s69, %s72
      %p81 = scmp.eq.s32.totalorder %s22, 1
      %p82 = por %p80, %p81
      %p83 = scmp.ne.s32.totalorder %s72, %s73
      %p84 = scmp.eq.s32.totalorder %s22, 0
      %p85 = por %p83, %p84
      %p86 = scmp.ne.s32.totalorder %s72, %s73
      %p87 = scmp.eq.s32.totalorder %s23, 1
      %p88 = por %p86, %p87
      %p90 = scmp.ne.s32.totalorder %s73, %s89
      %p91 = scmp.eq.s32.totalorder %s23, 0
      %p92 = por %p90, %p91
      %s93 = ssub.s32 %s24, %s36
      %p94 = scmp.eq.s32.totalorder %s93, 0
      %s96 = sadd.s32 %s95, 1
      %s97 = scalar_select %p94, %s95, %s96
      %p100 = pneg %p94
      %p101 = scmp.eq.s32.totalorder %s17, 1
      %p102 = por %p100, %p101
      %p103 = scmp.ne.s32.totalorder %s95, %s98
      %p104 = scmp.eq.s32.totalorder %s17, 0
      %p105 = por %p103, %p104
      %p106 = scmp.ne.s32.totalorder %s95, %s98
      %p107 = scmp.eq.s32.totalorder %s22, 1
      %p108 = por %p106, %p107
      %p109 = scmp.ne.s32.totalorder %s98, %s99
      %p110 = scmp.eq.s32.totalorder %s22, 0
      %p111 = por %p109, %p110
      %p112 = scmp.ne.s32.totalorder %s98, %s99
      %p113 = scmp.eq.s32.totalorder %s23, 1
      %p114 = por %p112, %p113
      %p116 = scmp.ne.s32.totalorder %s99, %s115
      %p117 = scmp.eq.s32.totalorder %s23, 0
      %p118 = por %p116, %p117
      %p119 = scmp.le.s32.totalorder 1, %s17
      %p120 = scmp.lt.s32.totalorder %s17, 3
      %p121 = pnand %p119, %p120
      %p122 = pneg %p121
      // Predicated region
      $region9: #{tpu_custom_call.1} parent=5 // pred_check
        _
      $region10: #{tpu_custom_call.1} parent=5 // pred_check_branch
        %124 = sbr.rel (%p121) target = $region12
      $region11: #{tpu_custom_call.1} parent=5 // pred_region
        %s125 = ssub.s32 %s17, 1
      $region12: #{tpu_custom_call.1} parent=5 // pred_fallthru
        _
      %p126 = scmp.lt.s32.totalorder %s17, 2
      // Predicated region
      $region13: #{tpu_custom_call.1} parent=5 // pred_check
        %p127 = pneg %p126
      $region14: #{tpu_custom_call.1} parent=5 // pred_check_branch
        %129 = sbr.rel (%p127) target = $region16
      $region15: #{tpu_custom_call.1} parent=5 // pred_region
        // Predicated region
        $region17: #{tpu_custom_call.1} parent=15 // pred_check
          %p130 = pneg %p51
        $region18: #{tpu_custom_call.1} parent=15 // pred_check_branch
          %132 = sbr.rel (%p130) target = $region20
        $region19: #{tpu_custom_call.1} parent=15 // pred_region
          %s133 = sand.u32 %s41, 1
          %s134 = scalar_lea.sflag [#allocation4], %s133
          %s135 = sand.u32 %s41, 1
          %s136 = smul.addr %s135, 4
          %s137 = scalar_lea.vmem [#allocation3], %s136
          %s139 = ssub.s32 64, 64
          %140 = vsyncadd %s134, %s139
          %s141 = smul.addr %s24, 2
          %s142 = sadd.s32 %s25, %s141
          %s143 = smul.addr %s142, 32
          %s144 = scalar_lea.hbm %s0, %s143
          %s145 = sshll.u32 %s137, 4
          %s146 = int_to_ptr.vmem [resolvable:$true] %s145
          %151 = dma.hbm_to_vmem [thread:$0]  %s144, 64, %s146, %s134, 32, 32, 2
        $region20: #{tpu_custom_call.1} parent=15 // pred_fallthru
          _
        // Predicated region
        $region21: #{tpu_custom_call.1} parent=15 // pred_check
          %p152 = pneg %p79
        $region22: #{tpu_custom_call.1} parent=15 // pred_check_branch
          %154 = sbr.rel (%p152) target = $region24
        $region23: #{tpu_custom_call.1} parent=15 // pred_region
          %s155 = sand.u32 %s69, 1
          %s156 = scalar_lea.sflag [#allocation7], %s155
          %s157 = sand.u32 %s69, 1
          %s158 = smul.addr %s157, 2
          %s159 = scalar_lea.vmem [#allocation6], %s158
          %s161 = ssub.s32 32, 32
          %162 = vsyncadd %s156, %s161
          %s163 = sadd.s32 %s25, %s24
          %s164 = smul.addr %s163, 32
          %s165 = scalar_lea.hbm %s1, %s164
          %s167 = sshll.u32 %s159, 4
          %s168 = int_to_ptr.vmem [resolvable:$true] %s167
          %170 = dma.hbm_to_vmem [thread:$0]  %s165, 32, %s168, %s156
        $region24: #{tpu_custom_call.1} parent=15 // pred_fallthru
          _
      $region16: #{tpu_custom_call.1} parent=5 // pred_fallthru
        _
      %p171 = scmp.le.s32.totalorder 1, %s17
      %p172 = scmp.lt.s32.totalorder %s17, 3
      %p173 = pnand %p171, %p172
      %p174 = pneg %p173
      // Predicated region
      $region25: #{tpu_custom_call.1} parent=5 // pred_check
        _
      $region26: #{tpu_custom_call.1} parent=5 // pred_check_branch
        %176 = sbr.rel (%p173) target = $region28
      $region27: #{tpu_custom_call.1} parent=5 // pred_region
        %s177 = ssub.s32 %s17, 1
        %s178 = sand.u32 %s44, 1
        %s179 = scalar_lea.sflag [#allocation4], %s178
        %s180 = sand.u32 %s44, 1
        %s181 = smul.addr %s180, 4
        %s182 = scalar_lea.vmem [#allocation3], %s181
        // Predicated region
        $region29: #{tpu_custom_call.1} parent=27 // pred_check
          %p183 = pneg %p57
        $region30: #{tpu_custom_call.1} parent=27 // pred_check_branch
          %185 = sbr.rel (%p183) target = $region32
        $region31: #{tpu_custom_call.1} parent=27 // pred_region
          %186 = dma.done %s179, 64
        $region32: #{tpu_custom_call.1} parent=27 // pred_fallthru
          _
        %s187 = sand.u32 %s72, 1
        %s188 = scalar_lea.sflag [#allocation7], %s187
        %s189 = sand.u32 %s72, 1
        %s190 = smul.addr %s189, 2
        %s191 = scalar_lea.vmem [#allocation6], %s190
        // Predicated region
        $region33: #{tpu_custom_call.1} parent=27 // pred_check
          %p192 = pneg %p85
        $region34: #{tpu_custom_call.1} parent=27 // pred_check_branch
          %194 = sbr.rel (%p192) target = $region36
        $region35: #{tpu_custom_call.1} parent=27 // pred_region
          %195 = dma.done %s188, 32
        $region36: #{tpu_custom_call.1} parent=27 // pred_fallthru
          _
        %s196 = sand.u32 %s44, 1
        %s197 = scalar_lea.sflag [#allocation4], %s196
        %s198 = sand.u32 %s44, 1
        %s199 = smul.addr %s198, 4
        %s200 = scalar_lea.vmem [#allocation3], %s199
        %p201 = pneg %p57
        %p202 = pneg %p54
        %s203 = sand.u32 %s72, 1
        %s204 = scalar_lea.sflag [#allocation7], %s203
        %s205 = sand.u32 %s72, 1
        %s206 = smul.addr %s205, 2
        %s207 = scalar_lea.vmem [#allocation6], %s206
        %p208 = pneg %p85
        %p209 = pneg %p82
        %p210 = pneg %p111
        %p211 = pneg %p108
        %s212 = sand.u32 %s98, 1
        %s213 = scalar_lea.sflag [#allocation5], %s212
        %s214 = sand.u32 %s98, 1
        %s215 = scalar_lea.vmem [#allocation8], %s214
        %p216 = scmp.eq.s32.totalorder %s27, 0
        // Predicated region
        $region37: #{tpu_custom_call.1} parent=27 // pred_check
          %p217 = pneg %p216
        $region38: #{tpu_custom_call.1} parent=27 // pred_check_branch
          %219 = sbr.rel (%p217) target = $region40
        $region39: #{tpu_custom_call.1} parent=27 // pred_region
          %220 = vst [vmem:[#allocation2] sm:$0x3] 0.0
        $region40: #{tpu_custom_call.1} parent=27 // pred_fallthru
          _
        %v221 = vld [vmem:[%s182] sm:$0x3]
        %v222 = vld [vmem:[%s182 + $0x2] sm:$0x3]
        %v223 = vld [vmem:[%s191] sm:$0x3]
        %vm224 = vcmask 1041408
        %v225 = vsel %vm224, %v221, -inf
        %v226 = vsel %vm224, %v222, -inf
        %v227 = vmax.f32 %v225, %v226
        %v228 = vsub.f32 %v221, %v227
        %v229 = vsub.f32 %v222, %v227
        %v230 = vmul.f32 %v228, 1.442695
        %v231 = vpow.pop %v230
        %v232 = vmul.f32 %v229, 1.442695
        %v233 = vpow.pop %v232
        %v234 = vsel %vm224, %v231, 0.0
        %v235 = vsel %vm224, %v233, 0.0
        %v236 = vadd.f32 %v234, %v235
        %vm237 = vcmp.eq.s32.totalorder %v223, 0
        %v238 = vsel %vm237, %v231, 0.0
        %v239 = vsel %vm237, 0.25, 0.0
        %vm240 = vcmp.eq.s32.totalorder %v223, 1
        %v241 = vsel %vm240, %v233, %v238
        %v242 = vsel %vm240, 0.75, %v239
        %v243 = vrcp.pop %v236
        %v244 = vmul.f32 %v241, %v243
        %v245 = vmul.f32 %v244, 0.99998
        %v246 = vadd.f32 %v245, 1e-05
        %v247 = vadd.f32 %v246, 1e-05
        %v248 = vlog2.pop %v247
        %v249 = vmul.f32 %v248, 0.6931472
        %v250 = vsub.f32 1.0, %v247
        %v251 = vmul.f32 %v250, %v250
        %v252 = vsub.f32 0.0, %v242
        %v253 = vmul.f32 %v252, %v251
        %v254 = vmul.f32 %v253, %v249
        %s255 = smul.u32 %s27, 2
        %v256 = vlaneseq
        %v257 = vshrl.u32 %v256, 7
        %v258 = vstv %s255
        %v259 = vadd.s32 %v258, %v257
        %v260 = vmul.u32 %v259, 128
        %v261 = vlaneseq
        %v262 = vand.u32 %v261, 127
        %v263 = vadd.s32 %v260, %v262
        %vm264 = vcmp.lt.s32.totalorder %v263, 256
        %vm265 = vcmp.ge.s32.totalorder %v223, 0
        %vm266 = vcmp.lt.s32.totalorder %v223, 2
        %vm267 = vmand %vm265, %vm266
        %vm268 = vmand %vm264, %vm267
        %v269 = vld [vmem:[#allocation2] sm:$0x3]
        %v270 = vsel %vm268, %v254, 0.0
        %v271 = vadd.f32 %v269, %v270
        %272 = vst [vmem:[#allocation2] sm:$0x3] %v271
        // Predicated region
        $region41: #{tpu_custom_call.1} parent=27 // pred_check
          %p273 = pneg %p216
        $region42: #{tpu_custom_call.1} parent=27 // pred_check_branch
          %275 = sbr.rel (%p273) target = $region44
        $region43: #{tpu_custom_call.1} parent=27 // pred_region
          %v276 = vld [vmem:[#allocation2] sm:$0x3]
          %v277 = vsel %vm224, %v276, 0.0
          %v278 = vrot.slane %v277, 4
          %v279 = vadd.f32 %v277, %v278
          %v280 = vrot.slane %v279, 2
          %v281 = vadd.f32 %v279, %v280
          %v282 = vrot.slane %v281, 1
          %v283 = vadd.f32 %v281, %v282
          %284 = vst [vmem:[%s215] sm:$0x1] %v283
        $region44: #{tpu_custom_call.1} parent=27 // pred_fallthru
          _
        %s285 = sand.u32 %s98, 1
        %s286 = scalar_lea.sflag [#allocation5], %s285
        %s287 = sand.u32 %s98, 1
        %s288 = scalar_lea.vmem [#allocation8], %s287
        // Predicated region
        $region45: #{tpu_custom_call.1} parent=27 // pred_check
          %p289 = pneg %p108
        $region46: #{tpu_custom_call.1} parent=27 // pred_check_branch
          %291 = sbr.rel (%p289) target = $region48
        $region47: #{tpu_custom_call.1} parent=27 // pred_region
          %s293 = ssub.s32 16, 16
          %294 = vsyncadd %s286, %s293
          %s295 = smul.addr %s26, 16
          %s296 = scalar_lea.hbm %s2, %s295
          %s298 = sshll.u32 %s288, 4
          %s299 = int_to_ptr.vmem [resolvable:$true] %s298
          %301 = dma.vmem_to_hbm [thread:$0]  %s299, 16, %s296, %s286
        $region48: #{tpu_custom_call.1} parent=27 // pred_fallthru
          _
      $region28: #{tpu_custom_call.1} parent=5 // pred_fallthru
        _
      %p302 = scmp.le.s32.totalorder 2, %s17
      // Predicated region
      $region49: #{tpu_custom_call.1} parent=5 // pred_check
        %p303 = pneg %p302
      $region50: #{tpu_custom_call.1} parent=5 // pred_check_branch
        %305 = sbr.rel (%p303) target = $region52
      $region51: #{tpu_custom_call.1} parent=5 // pred_region
        %s306 = ssub.s32 %s17, 2
        // Predicated region
        $region53: #{tpu_custom_call.1} parent=51 // pred_check
          %p307 = pneg %p114
        $region54: #{tpu_custom_call.1} parent=51 // pred_check_branch
          %309 = sbr.rel (%p307) target = $region56
        $region55: #{tpu_custom_call.1} parent=51 // pred_region
          %s310 = sand.u32 %s99, 1
          %s311 = scalar_lea.sflag [#allocation5], %s310
          %s312 = sand.u32 %s99, 1
          %s313 = scalar_lea.vmem [#allocation8], %s312
          %314 = dma.done %s311, 16
        $region56: #{tpu_custom_call.1} parent=51 // pred_fallthru
          _
      $region52: #{tpu_custom_call.1} parent=5 // pred_fallthru
        _
    $region6: #{tpu_custom_call.1} parent=1 // loop_footer
      %s21 = sadd.s32 1, %s17
    $region7: #{tpu_custom_call.1} parent=1 // loop_footer_branch
      %16 = sbr.rel target = $region3
    $region8: #{tpu_custom_call.1} parent=1 // loop_exit
      _
    %315 = vsyncpa [#allocation4], 1
    %s316 = scalar_lea.sflag [#allocation4], 1
    %317 = vsyncpa %s316, 1
    %318 = vsyncpa [#allocation7], 1
    %s319 = scalar_lea.sflag [#allocation7], 1
    %320 = vsyncpa %s319, 1
    %321 = vsyncpa [#allocation5], 1
    %s322 = scalar_lea.sflag [#allocation5], 1
    %323 = vsyncpa %s322, 1

</llo_original>
